<compile_context>
chip_gen: v7x
topology: tpu7x:2x2x1
jax: 0.10.0
libtpu: 0.0.40
codegen_flags: <defaults>
</compile_context>

<pallas_src>
import jax
import jax.numpy as jnp
from jax.experimental import pallas as pl
from jax.experimental.pallas import tpu as pltpu


def fused_linear_softmax_kernel(x_ref, w_ref, b_ref, o_ref):
    # x: (TB, I) f32, w: (I, O) f32, b: (1, O) f32, o: (TB, O) f32/bf16
    logits = jnp.dot(x_ref[...], w_ref[...],
                     preferred_element_type=jnp.float32) + b_ref[...]
    # numerically stable softmax along the class axis (dim=1), all in f32
    m = jnp.max(logits, axis=-1, keepdims=True)
    e = jnp.exp(logits - m)
    denom = jnp.sum(e, axis=-1, keepdims=True)
    o_ref[...] = (e * pl.reciprocal(denom, approx=False)).astype(o_ref.dtype)


def fold_params(w1, b1, w2, b2):
    """Fold the two activation-free Linear layers. Call ONCE at param-load time.

    w1: (I, H), b1: (1, H), w2: (H, O), b2: (1, O)  ->  w: (I, O), b: (1, O)
    Mathematically exact: (x @ w1 + b1) @ w2 + b2 == x @ (w1 @ w2) + (b1 @ w2 + b2).
    """
    w = jnp.dot(w1, w2, preferred_element_type=jnp.float32)
    b = jnp.dot(b1, w2, preferred_element_type=jnp.float32) + b2
    return w, b


def _round_up(v, m):
    return ((v + m - 1) // m) * m


def simple_network_forward_folded(x, w, b, *, block_b=4096,
                                  out_dtype=jnp.float32, min_grid_steps=2):
    """Hot-path forward: single pallas_call on pre-folded params.

    x: (B, I) f32, w: (I, O) f32, b: (1, O) f32  ->  (B, O) out_dtype
    """
    B, I = x.shape
    O = w.shape[1]

    # Batch tile: large to amortize per-step overhead, capped so the grid has
    # >= min_grid_steps steps when B > 8 (keeps both v7x TensorCores busy;
    # harmless no-op on single-core v5e/v6e).
    tb = min(block_b, B)
    if B > 8 and min_grid_steps > 1:
        tb = min(tb, _round_up(pl.cdiv(B, min_grid_steps), 8))
    if tb != B and tb % 8 != 0:
        tb = max(8, (tb // 8) * 8)
    grid = (pl.cdiv(B, tb),)

    return pl.pallas_call(
        fused_linear_softmax_kernel,
        out_shape=jax.ShapeDtypeStruct((B, O), out_dtype),
        grid_spec=pltpu.PrefetchScalarGridSpec(
            num_scalar_prefetch=0,
            grid=grid,
            in_specs=[
                pl.BlockSpec((tb, I), lambda i: (i, 0)),   # x tile per step
                pl.BlockSpec((I, O), lambda i: (0, 0)),    # folded weight
                pl.BlockSpec((1, O), lambda i: (0, 0)),    # folded bias
            ],
            out_specs=pl.BlockSpec((tb, O), lambda i: (i, 0)),
        ),
        compiler_params=pltpu.CompilerParams(
            dimension_semantics=("parallel",)),
    )(x, w, b)


def simple_network_forward(x, w1, b1, w2, b2, **kwargs):
    """Convenience wrapper (folds per call). Prefer fold_params + *_folded in hot paths."""
    w, b = fold_params(w1, b1, w2, b2)
    return simple_network_forward_folded(x, w, b, **kwargs)


def init_params(key, input_nodes=16, hidden_size=16, output_nodes=10):
    """Deterministic init mirroring nn.Linear (W stored (out,in), x @ W^T + b).

    Returned already transposed to (in, out) with (1, out) bias rows.
    """
    k1, k2, k3, k4 = jax.random.split(key, 4)
    bound1 = 1.0 / jnp.sqrt(input_nodes)
    bound2 = 1.0 / jnp.sqrt(hidden_size)
    w1 = jax.random.uniform(k1, (hidden_size, input_nodes), jnp.float32, -bound1, bound1)
    b1 = jax.random.uniform(k2, (hidden_size,), jnp.float32, -bound1, bound1)
    w2 = jax.random.uniform(k3, (output_nodes, hidden_size), jnp.float32, -bound2, bound2)
    b2 = jax.random.uniform(k4, (output_nodes,), jnp.float32, -bound2, bound2)
    return w1.T, b1[None, :], w2.T, b2[None, :]


def _reference(x, w1, b1, w2, b2):
    """Pure-JAX f32 reference identical to the PyTorch module."""
    h = x @ w1 + b1
    logits = h @ w2 + b2
    return jax.nn.softmax(logits, axis=1)


if __name__ == "__main__":
    key = jax.random.PRNGKey(0)
    kx, kxl, kp = jax.random.split(key, 3)

    input_nodes, hidden_size, output_nodes = 16, 16, 10
    w1, b1, w2, b2 = init_params(kp, input_nodes, hidden_size, output_nodes)

    # Fold once at parameter-load time (hoisted out of the per-call hot path).
    w, b = fold_params(w1, b1, w2, b2)
    w = jax.block_until_ready(w)
    b = jax.block_until_ready(b)

    # --- small batch (typical usage of the module) ---
    batch = 8
    x = jax.random.normal(kx, (batch, input_nodes), jnp.float32)
    out = jax.block_until_ready(simple_network_forward_folded(x, w, b))
    ref = _reference(x, w1, b1, w2, b2)

    assert out.shape == (batch, output_nodes)
    assert out.dtype == jnp.float32
    assert jnp.allclose(jnp.sum(out, axis=1), 1.0, atol=1e-5)
    assert jnp.allclose(out, ref, atol=1e-4)

    # --- larger, non-tile-multiple batch: exercises >=2 parallel grid steps
    #     and the partial last block (padded rows are computed but discarded) ---
    batch_l = 1000
    x_l = jax.random.normal(kxl, (batch_l, input_nodes), jnp.float32)
    out_l = jax.block_until_ready(simple_network_forward_folded(x_l, w, b))
    ref_l = _reference(x_l, w1, b1, w2, b2)

    assert out_l.shape == (batch_l, output_nodes)
    assert jnp.allclose(jnp.sum(out_l, axis=1), 1.0, atol=1e-5)
    assert jnp.allclose(out_l, ref_l, atol=1e-4)

    # --- bf16 output path (halves the dominant HBM output stream at large B) ---
    out_bf16 = jax.block_until_ready(
        simple_network_forward_folded(x_l, w, b, out_dtype=jnp.bfloat16))
    assert out_bf16.dtype == jnp.bfloat16
    assert jnp.allclose(out_bf16.astype(jnp.float32), ref_l, atol=1e-2)

    print("KERNEL_OK")
</pallas_src>

<mosaic_0001>
module attributes {stable_mosaic.version = 11 : i64} {
  func.func @fused_linear_softmax_kernel(%arg0: i32, %arg1: memref<8x16xf32, #tpu.memory_space<vmem>>, %arg2: memref<16x10xf32, #tpu.memory_space<vmem>>, %arg3: memref<1x10xf32, #tpu.memory_space<vmem>>, %arg4: memref<8x10xf32, #tpu.memory_space<vmem>>) attributes {dimension_semantics = [#tpu.dimension_semantics<parallel>], iteration_bounds = array<i64: 1>, scalar_prefetch = 0 : i64, scratch_operands = 0 : i64, tpu.core_type = #tpu.core_type<tc>, window_params = [{transform_indices = @transform_0, window_bounds = array<i64: 8, 16>}, {pipeline_mode = #tpu.pipeline_mode<synchronous>, transform_indices = @transform_1, window_bounds = array<i64: 16, 10>}, {pipeline_mode = #tpu.pipeline_mode<synchronous>, transform_indices = @transform_2, window_bounds = array<i64: 1, 10>}, {transform_indices = @transform_3, window_bounds = array<i64: 8, 10>}]} {
    %c0 = arith.constant 0 : index
    %c0_0 = arith.constant 0 : index
    %0 = vector.load %arg1[%c0, %c0_0] : memref<8x16xf32, #tpu.memory_space<vmem>>, vector<8x16xf32>
    %c0_1 = arith.constant 0 : index
    %c0_2 = arith.constant 0 : index
    %1 = vector.load %arg2[%c0_1, %c0_2] : memref<16x10xf32, #tpu.memory_space<vmem>>, vector<16x10xf32>
    %cst = arith.constant dense<0.000000e+00> : vector<8x10xf32>
    %2 = tpu.matmul %0, %1, %cst {dimension_numbers = #tpu.dot_dimension_numbers<[1], [0], [0], [1], [0, 0, 1, 1], [], []>} : vector<8x16xf32>, vector<16x10xf32>, vector<8x10xf32> -> vector<8x10xf32>
    %c0_3 = arith.constant 0 : index
    %c0_4 = arith.constant 0 : index
    %3 = vector.load %arg3[%c0_3, %c0_4] : memref<1x10xf32, #tpu.memory_space<vmem>>, vector<1x10xf32>
    %4 = vector.broadcast %3 : vector<1x10xf32> to vector<8x10xf32>
    %5 = arith.addf %2, %4 : vector<8x10xf32>
    %cst_5 = arith.constant dense<0xFF800000> : vector<8xf32>
    %6 = vector.multi_reduction <maximumf>, %5, %cst_5 [1] : vector<8x10xf32> to vector<8xf32>
    %7 = vector.shape_cast %6 : vector<8xf32> to vector<8x1xf32>
    %8 = vector.broadcast %7 : vector<8x1xf32> to vector<8x10xf32>
    %9 = arith.subf %5, %8 : vector<8x10xf32>
    %10 = math.exp %9 : vector<8x10xf32>
    %cst_6 = arith.constant dense<0.000000e+00> : vector<8xf32>
    %11 = vector.multi_reduction <add>, %10, %cst_6 [1] : vector<8x10xf32> to vector<8xf32>
    %12 = vector.shape_cast %11 : vector<8xf32> to vector<8x1xf32>
    %13 = tpu.reciprocal %12 : vector<8x1xf32> -> vector<8x1xf32>
    %14 = vector.broadcast %13 : vector<8x1xf32> to vector<8x10xf32>
    %15 = arith.mulf %10, %14 : vector<8x10xf32>
    %c0_7 = arith.constant 0 : index
    %c0_8 = arith.constant 0 : index
    %16 = vector.load %arg4[%c0_7, %c0_8] : memref<8x10xf32, #tpu.memory_space<vmem>>, vector<8x10xf32>
    tpu.vector_store %arg4[%c0_7, %c0_8], %15 {strides = array<i32>} : memref<8x10xf32, #tpu.memory_space<vmem>>, vector<8x10xf32>,
    return
  }
  func.func @transform_0(%arg0: i32) -> (i32, i32) {
    %c0_i32 = arith.constant 0 : i32
    %c0_i32_0 = arith.constant 0 : i32
    return %arg0, %c0_i32 : i32, i32
  }
  func.func @transform_1(%arg0: i32) -> (i32, i32) {
    %c0_i32 = arith.constant 0 : i32
    %c0_i32_0 = arith.constant 0 : i32
    %c0_i32_1 = arith.constant 0 : i32
    return %c0_i32, %c0_i32_0 : i32, i32
  }
  func.func @transform_2(%arg0: i32) -> (i32, i32) {
    %c0_i32 = arith.constant 0 : i32
    %c0_i32_0 = arith.constant 0 : i32
    %c0_i32_1 = arith.constant 0 : i32
    return %c0_i32, %c0_i32_0 : i32, i32
  }
  func.func @transform_3(%arg0: i32) -> (i32, i32) {
    %c0_i32 = arith.constant 0 : i32
    %c0_i32_0 = arith.constant 0 : i32
    return %arg0, %c0_i32 : i32, i32
  }
}

</mosaic_0001>

<llo_original>
// kernel: tpu_custom_call.1
$region0: #{tpu_custom_call.1}
  #allocation0 [shape = 'u32[]', space=smem, size = 0x4, offset = 0x4, fixed_abs, tag = 'smem constant byte address 0x4 - core index']
  #allocation1 [shape = 'u32[144,128]{1,0:T(1,128)}', space=vmem, size = 0x12000, scoped, tag = 'internal scratch']
  %s0 = inlined_call_operand.hbm [shape: f32[8,16], index: 0, kind: input, shape index: {}]
  %s1 = inlined_call_operand.hbm [shape: f32[16,10], index: 1, kind: input, shape index: {}]
  %s2 = inlined_call_operand.vmem [shape: f32[1,10], index: 2, kind: input, shape index: {}]
  %s3 = inlined_call_operand.hbm [shape: f32[8,10], index: 3, kind: output, shape index: {}]
  %s4 = sld [smem:[#allocation0]]
  $region30: #{tpu_custom_call.1} parent=0
    _
  %s6 = ssub.s32 1, %s4
  %s7 = scalar_select 0, %s6, %s4
  $region1: #{tpu_custom_call.1} parent=0
    #allocation2 [shape = 'u8[4096]{0}', space=vmem, size = 0x1000, scoped, tag = 'input window, operand 0, single buffered']
    #allocation3 [shape = 's32[1]{0}', space=sflag, size = 0x4, scoped, tag = 'scoped memory for tpu_custom_call.1']
    #allocation4 [shape = 's32[1]{0}', space=sflag, size = 0x4, scoped, tag = 'scoped memory for tpu_custom_call.1']
    #allocation5 [shape = 'u8[8192]{0}', space=vmem, size = 0x2000, scoped, tag = 'input window, operand 1, single buffered']
    #allocation6 [shape = 's32[1]{0}', space=sflag, size = 0x4, scoped, tag = 'scoped memory for tpu_custom_call.1']
    #allocation7 [shape = 'u8[4096]{0}', space=vmem, size = 0x1000, scoped, tag = 'output window, operand 0, single buffered']
    %8 = vsyncpa [#allocation3], 0
    %9 = vsyncpa [#allocation6], 0
    %10 = vsyncpa [#allocation4], 0
    // Predicated region
    $region2: #{tpu_custom_call.1} parent=1 // pred_check
      _
    $region3: #{tpu_custom_call.1} parent=1 // pred_check_branch
      %12 = sbr.rel (0) target = $region5
    $region4: #{tpu_custom_call.1} parent=1 // pred_region
      %s14 = ssub.s32 128, 128
      %15 = vsyncadd [#allocation3], %s14
      %s17 = sshll.u32 [#allocation2], 4
      %s18 = int_to_ptr.vmem [resolvable:$true] %s17
      %20 = dma.hbm_to_vmem [thread:$0]  %s0, 128, %s18, [#allocation3]
    $region5: #{tpu_custom_call.1} parent=1 // pred_fallthru
      _
    // Predicated region
    $region6: #{tpu_custom_call.1} parent=1 // pred_check
      _
    $region7: #{tpu_custom_call.1} parent=1 // pred_check_branch
      %22 = sbr.rel (0) target = $region9
    $region8: #{tpu_custom_call.1} parent=1 // pred_region
      %s24 = ssub.s32 256, 256
      %25 = vsyncadd [#allocation6], %s24
      %s26 = sshll.u32 [#allocation5], 4
      %s27 = int_to_ptr.vmem [resolvable:$true] %s26
      %32 = dma.hbm_to_vmem [thread:$0]  %s1, 256, %s27, [#allocation6], 128, 128, 8
    $region9: #{tpu_custom_call.1} parent=1 // pred_fallthru
      _
    // Predicated region
    $region10: #{tpu_custom_call.1} parent=1 // pred_check
      _
    $region11: #{tpu_custom_call.1} parent=1 // pred_check_branch
      %34 = sbr.rel (0) target = $region13
    $region12: #{tpu_custom_call.1} parent=1 // pred_region
      _
    $region13: #{tpu_custom_call.1} parent=1 // pred_fallthru
      _
    // Predicated region
    $region14: #{tpu_custom_call.1} parent=1 // pred_check
      _
    $region15: #{tpu_custom_call.1} parent=1 // pred_check_branch
      %36 = sbr.rel (0) target = $region17
    $region16: #{tpu_custom_call.1} parent=1 // pred_region
      %37 = dma.done [#allocation3], 128
    $region17: #{tpu_custom_call.1} parent=1 // pred_fallthru
      _
    // Predicated region
    $region18: #{tpu_custom_call.1} parent=1 // pred_check
      _
    $region19: #{tpu_custom_call.1} parent=1 // pred_check_branch
      %39 = sbr.rel (0) target = $region21
    $region20: #{tpu_custom_call.1} parent=1 // pred_region
      %40 = dma.done [#allocation6], 256
    $region21: #{tpu_custom_call.1} parent=1 // pred_fallthru
      _
    %v41 = vld [vmem:[#allocation2] sm:$0xff]
    %v42 = vld [vmem:[#allocation5] sm:$0xff]
    %v43 = vld [vmem:[#allocation5 + $0x8] sm:$0xff]
    %v44 = vld [vmem:[%s2] sm:$0x1]
    %v46 = vlaneseq
    %v47 = vshrl.u32 %v46, 7
    %v48 = vsub.s32 0, %v47
    %v49 = vrot.slane %v44, %v48
    %vm51 = vcmask 130048
    %v53 = vsel %vm51, %v41, 0
    %55 = vmatprep.subr.mxu0 0.0
    %56 = vmatpush1.msra.mxu0 %v42
    %57 = vmatprep.subr.mxu0 0.0
    %58 = vmatpush1.msra.mxu0 %v43
    %59 = vmatprep.subr.mxu0 0.0
    %60 = vmatpush1.msra.mxu0 0.0
    %61 = vmatprep.subr.mxu0 0.0
    %62 = vmatpush1.msra.mxu0 0.0
    %63 = vmatprep.subr.mxu0 0.0
    %64 = vmatpush1.msra.mxu0 0.0
    %65 = vmatprep.subr.mxu0 0.0
    %66 = vmatpush1.msra.mxu0 0.0
    %67 = vmatprep.subr.mxu0 0.0
    %68 = vmatpush1.msra.mxu0 0.0
    %69 = vmatprep.subr.mxu0 0.0
    %70 = vmatpush1.msra.mxu0 0.0
    %71 = vmatprep.subr.mxu0 0.0
    %72 = vmatpush1.msra.mxu0 0.0
    %73 = vmatprep.subr.mxu0 0.0
    %74 = vmatpush1.msra.mxu0 0.0
    %75 = vmatprep.subr.mxu0 0.0
    %76 = vmatpush1.msra.mxu0 0.0
    %77 = vmatprep.subr.mxu0 0.0
    %78 = vmatpush1.msra.mxu0 0.0
    %79 = vmatprep.subr.mxu0 0.0
    %80 = vmatpush1.msra.mxu0 0.0
    %81 = vmatprep.subr.mxu0 0.0
    %82 = vmatpush1.msra.mxu0 0.0
    %83 = vmatprep.subr.mxu0 0.0
    %84 = vmatpush1.msra.mxu0 0.0
    %85 = vmatprep.subr.mxu0 0.0
    %86 = vmatpush1.msra.mxu0 0.0
    %87 = vmatprep.subr.mxu0 0.0
    %88 = vmatpush1.msra.mxu0 0.0
    %89 = vmatprep.subr.mxu0 0.0
    %90 = vmatpush1.msra.mxu0 0.0
    %91 = vmatprep.subr.mxu0 0.0
    %92 = vmatpush1.msra.mxu0 0.0
    %93 = vmatprep.subr.mxu0 0.0
    %94 = vmatpush1.msra.mxu0 0.0
    %95 = vmatprep.subr.mxu0 0.0
    %96 = vmatpush1.msra.mxu0 0.0
    %97 = vmatprep.subr.mxu0 0.0
    %98 = vmatpush1.msra.mxu0 0.0
    %99 = vmatprep.subr.mxu0 0.0
    %100 = vmatpush1.msra.mxu0 0.0
    %101 = vmatprep.subr.mxu0 0.0
    %102 = vmatpush1.msra.mxu0 0.0
    %103 = vmatprep.subr.mxu0 0.0
    %104 = vmatpush1.msra.mxu0 0.0
    %105 = vmatprep.subr.mxu0 0.0
    %106 = vmatpush1.msra.mxu0 0.0
    %107 = vmatprep.subr.mxu0 0.0
    %108 = vmatpush1.msra.mxu0 0.0
    %109 = vmatprep.subr.mxu0 0.0
    %110 = vmatpush1.msra.mxu0 0.0
    %111 = vmatprep.subr.mxu0 0.0
    %112 = vmatpush1.msra.mxu0 0.0
    %113 = vmatprep.subr.mxu0 0.0
    %114 = vmatpush1.msra.mxu0 0.0
    %115 = vmatprep.subr.mxu0 0.0
    %116 = vmatpush1.msra.mxu0 0.0
    %117 = vmatprep.subr.mxu0 0.0
    %118 = vmatpush1.msra.mxu0 0.0
    %119 = vmatprep.mubr.f32.mxu0 0.0
    %120 = vmatmul.mubr.f32.gmra.mrb[0].mxu0 %v53
    %v121 = vpop.f32.mrb[0].mxu0
    %v122 = vadd.f32 %v49, %v121
    %v123 = vpop.f32.mrb[0].mxu0
    %124 = vdwg.mxu0
    %vm125 = vcmask 80896
    %v126 = vsel %vm125, %v122, -inf
    %127 = vmax.xlane.f32.xlu0 %v126
    %v128 = vpop.xlane.xlu0 %127
    %v129 = vsub.f32 %v122, %v128
    %v130 = vmul.f32 %v129, 1.442695
    %v131 = vpow.pop %v130
    %v132 = vsel %vm125, %v131, 0.0
    %133 = vadd.xlane.f32.xlu0 %v132
    %v134 = vpop.xlane.xlu0 %133
    %v135 = vrcp.pop %v134
    %v136 = vmul.f32 %v131, %v135
    %137 = vst.msk [vmem:[#allocation7] sm:$0xff] %vm125, %v136
    // Predicated region
    $region22: #{tpu_custom_call.1} parent=1 // pred_check
      _
    $region23: #{tpu_custom_call.1} parent=1 // pred_check_branch
      %139 = sbr.rel (0) target = $region25
    $region24: #{tpu_custom_call.1} parent=1 // pred_region
      %s141 = ssub.s32 128, 128
      %142 = vsyncadd [#allocation4], %s141
      %s144 = sshll.u32 [#allocation7], 4
      %s145 = int_to_ptr.vmem [resolvable:$true] %s144
      %147 = dma.vmem_to_hbm [thread:$0]  %s145, 128, %s3, [#allocation4]
    $region25: #{tpu_custom_call.1} parent=1 // pred_fallthru
      _
    // Predicated region
    $region26: #{tpu_custom_call.1} parent=1 // pred_check
      _
    $region27: #{tpu_custom_call.1} parent=1 // pred_check_branch
      %149 = sbr.rel (0) target = $region29
    $region28: #{tpu_custom_call.1} parent=1 // pred_region
      %150 = dma.done [#allocation4], 128
    $region29: #{tpu_custom_call.1} parent=1 // pred_fallthru
      _
    %151 = vsyncpa [#allocation3], 1
    %152 = vsyncpa [#allocation6], 1
    %153 = vsyncpa [#allocation4], 1

</llo_original>
